<compile_context>
chip_gen: v7x
topology: tpu7x:2x2x1
jax: 0.10.0
libtpu: 0.0.40
codegen_flags: <defaults>
</compile_context>

<pallas_src>
from functools import partial

import jax
import jax.numpy as jnp
from jax.experimental import pallas as pl
from jax.experimental.pallas import tpu as pltpu

IN_FEATURES = 326      # K (full-extent last dim of x blocks -- allowed un-padded)
OUT_FEATURES = 62      # logical N (== full array extent of the output's last dim)
N_PAD = 128            # lane-dense padded N used only for the resident weight slab
TM_MAX = 1024          # max batch tile (multiple of 8)


def _round8(n: int) -> int:
    return ((n + 7) // 8) * 8


# ----------------------------------------------------------------------------
# Pallas kernel
# ----------------------------------------------------------------------------
def _linear_kernel(x_ref, wt_ref, b_ref, o_ref):
    """y = (x @ W_pad)[:, :62] + b   (one batch tile per grid step, MXU matmul).

    Invariant: wt_ref columns 62..127 are exact zeros, so slicing the f32
    accumulator to the first 62 lanes before the bias add is lossless.
    """
    acc = jnp.dot(x_ref[...], wt_ref[...], preferred_element_type=jnp.float32)
    o_ref[...] = (acc[:, :OUT_FEATURES] + b_ref[...]).astype(o_ref.dtype)


@partial(jax.jit, static_argnames=("tm",))
def _linear_forward(x, wt_pad, bias2d, *, tm):
    batch = x.shape[0]
    grid = (pl.cdiv(batch, tm),)
    return pl.pallas_call(
        _linear_kernel,
        out_shape=jax.ShapeDtypeStruct((batch, OUT_FEATURES), x.dtype),
        grid=grid,
        in_specs=[
            # x tile marches down the batch axis; K=326 is full-extent.
            pl.BlockSpec((tm, IN_FEATURES), lambda i: (i, 0)),
            # weight / bias pinned (resident across the whole grid).
            pl.BlockSpec((IN_FEATURES, N_PAD), lambda i: (0, 0)),
            pl.BlockSpec((1, OUT_FEATURES), lambda i: (0, 0)),
        ],
        # Output is written at its logical (batch, 62) shape: no post-kernel
        # HBM slicing pass.  62 == full array extent, so the block is legal;
        # trailing partial batch blocks are handled by Pallas boundary masking.
        out_specs=pl.BlockSpec((tm, OUT_FEATURES), lambda i: (i, 0)),
        compiler_params=pltpu.CompilerParams(
            dimension_semantics=("parallel",)
        ),
    )(x, wt_pad, bias2d)


# ----------------------------------------------------------------------------
# Python-level model wrappers
# ----------------------------------------------------------------------------
class DummyModelPallas:
    """Equivalent of torch.nn.Linear(326, 62) with deterministic params."""

    def __init__(self):
        key = jax.random.PRNGKey(42)
        kw, kb = jax.random.split(key)
        bound = 1.0 / (IN_FEATURES ** 0.5)  # torch.nn.Linear default init range
        self.weight = jax.random.uniform(
            kw, (OUT_FEATURES, IN_FEATURES), jnp.float32, -bound, bound
        )
        self.bias = jax.random.uniform(
            kb, (OUT_FEATURES,), jnp.float32, -bound, bound
        )

        # Hoisted out of forward(): transpose + zero-pad N to a lane-dense 128
        # slab for the MXU.  Columns 62..127 are exactly zero (invariant relied
        # on by the in-kernel accumulator slice).
        wt = self.weight.T                                   # [326, 62]
        self.wt_pad = (
            jnp.zeros((IN_FEATURES, N_PAD), jnp.float32)
            .at[:, :OUT_FEATURES]
            .set(wt)
        )                                                    # [326, 128]
        self.bias2d = self.bias.reshape(1, OUT_FEATURES)     # [1, 62]

    @staticmethod
    def _pick_tm(batch: int) -> int:
        # Tiny batch: single full-extent block (always legal).
        if batch <= 8:
            return batch
        # Aim for >= 4 grid steps so (a) v7x's two TensorCores both get work
        # via the "parallel" axis and (b) consecutive tiles' DMA/compute/store
        # actually pipeline; cap the tile at TM_MAX (VMEM is not a constraint).
        return min(TM_MAX, max(8, _round8(pl.cdiv(batch, 4))))

    def forward(self, x):
        tm = self._pick_tm(x.shape[0])
        return _linear_forward(x, self.wt_pad, self.bias2d, tm=tm)


class RiggedModelPallas(DummyModelPallas):
    """forward(x) returns the fixed `output` tensor, ignoring x (as in PyTorch)."""

    def __init__(self, output):
        super().__init__()  # still constructs layer_1's parameters, like the torch code
        self.output = jnp.asarray(output)

    def forward(self, x):
        # x is accepted but intentionally unused (matches RiggedModel semantics).
        # Returning the already-materialized array directly is zero-cost; a
        # Pallas copy kernel here would only add an HBM round trip + dispatch.
        return self.output


# ----------------------------------------------------------------------------
# Demo / correctness check
# ----------------------------------------------------------------------------
if __name__ == "__main__":
    key = jax.random.PRNGKey(0)
    kx, ko, kx2 = jax.random.split(key, 3)

    dummy = DummyModelPallas()

    # --- small batch (single full-extent block, jitted dispatch) ------------
    batch = 2
    x = jax.random.normal(kx, (batch, IN_FEATURES), jnp.float32)
    rigged_output = jax.random.normal(ko, (batch, OUT_FEATURES), jnp.float32)

    y_lin = jax.block_until_ready(dummy.forward(x))
    y_ref = (
        jnp.dot(x, dummy.weight.T, precision=jax.lax.Precision.HIGHEST)
        + dummy.bias
    )
    assert y_lin.shape == (batch, OUT_FEATURES)
    assert jnp.allclose(y_lin, y_ref, atol=1e-3, rtol=1e-3)

    # --- larger batch (multi-step grid + partial trailing block) ------------
    batch2 = 520
    x2 = jax.random.normal(kx2, (batch2, IN_FEATURES), jnp.float32)
    y_lin2 = jax.block_until_ready(dummy.forward(x2))
    y_ref2 = (
        jnp.dot(x2, dummy.weight.T, precision=jax.lax.Precision.HIGHEST)
        + dummy.bias
    )
    assert y_lin2.shape == (batch2, OUT_FEATURES)
    assert jnp.allclose(y_lin2, y_ref2, atol=1e-3, rtol=1e-3)

    # --- RiggedModel path: forward ignores x and returns self.output exactly
    rigged = RiggedModelPallas(rigged_output)
    y_rig = jax.block_until_ready(rigged.forward(x))
    assert y_rig.shape == rigged_output.shape
    assert jnp.array_equal(y_rig, rigged_output)

    print("KERNEL_OK")
</pallas_src>

<mosaic_0001>
module attributes {stable_mosaic.version = 11 : i64} {
  func.func @_linear_kernel(%arg0: i32, %arg1: memref<2x326xf32, #tpu.memory_space<vmem>>, %arg2: memref<326x128xf32, #tpu.memory_space<vmem>>, %arg3: memref<1x62xf32, #tpu.memory_space<vmem>>, %arg4: memref<2x62xf32, #tpu.memory_space<vmem>>) attributes {dimension_semantics = [#tpu.dimension_semantics<parallel>], iteration_bounds = array<i64: 1>, scalar_prefetch = 0 : i64, scratch_operands = 0 : i64, tpu.core_type = #tpu.core_type<tc>, window_params = [{transform_indices = @transform_0, window_bounds = array<i64: 2, 326>}, {pipeline_mode = #tpu.pipeline_mode<synchronous>, transform_indices = @transform_1, window_bounds = array<i64: 326, 128>}, {pipeline_mode = #tpu.pipeline_mode<synchronous>, transform_indices = @transform_2, window_bounds = array<i64: 1, 62>}, {transform_indices = @transform_3, window_bounds = array<i64: 2, 62>}]} {
    %c0 = arith.constant 0 : index
    %c0_0 = arith.constant 0 : index
    %0 = vector.load %arg1[%c0, %c0_0] : memref<2x326xf32, #tpu.memory_space<vmem>>, vector<2x326xf32>
    %c0_1 = arith.constant 0 : index
    %c0_2 = arith.constant 0 : index
    %1 = vector.load %arg2[%c0_1, %c0_2] : memref<326x128xf32, #tpu.memory_space<vmem>>, vector<326x128xf32>
    %cst = arith.constant dense<0.000000e+00> : vector<2x128xf32>
    %2 = tpu.matmul %0, %1, %cst {dimension_numbers = #tpu.dot_dimension_numbers<[1], [0], [0], [1], [0, 0, 1, 1], [], []>} : vector<2x326xf32>, vector<326x128xf32>, vector<2x128xf32> -> vector<2x128xf32>
    %3 = vector.extract_strided_slice %2 {offsets = [0, 0], sizes = [2, 62], strides = [1, 1]} : vector<2x128xf32> to vector<2x62xf32>
    %c0_3 = arith.constant 0 : index
    %c0_4 = arith.constant 0 : index
    %4 = vector.load %arg3[%c0_3, %c0_4] : memref<1x62xf32, #tpu.memory_space<vmem>>, vector<1x62xf32>
    %5 = vector.broadcast %4 : vector<1x62xf32> to vector<2x62xf32>
    %6 = arith.addf %3, %5 : vector<2x62xf32>
    %c0_5 = arith.constant 0 : index
    %c0_6 = arith.constant 0 : index
    %7 = vector.load %arg4[%c0_5, %c0_6] : memref<2x62xf32, #tpu.memory_space<vmem>>, vector<2x62xf32>
    tpu.vector_store %arg4[%c0_5, %c0_6], %6 {strides = array<i32>} : memref<2x62xf32, #tpu.memory_space<vmem>>, vector<2x62xf32>,
    return
  }
  func.func @transform_0(%arg0: i32) -> (i32, i32) {
    %c0_i32 = arith.constant 0 : i32
    %c0_i32_0 = arith.constant 0 : i32
    return %arg0, %c0_i32 : i32, i32
  }
  func.func @transform_1(%arg0: i32) -> (i32, i32) {
    %c0_i32 = arith.constant 0 : i32
    %c0_i32_0 = arith.constant 0 : i32
    %c0_i32_1 = arith.constant 0 : i32
    return %c0_i32, %c0_i32_0 : i32, i32
  }
  func.func @transform_2(%arg0: i32) -> (i32, i32) {
    %c0_i32 = arith.constant 0 : i32
    %c0_i32_0 = arith.constant 0 : i32
    %c0_i32_1 = arith.constant 0 : i32
    return %c0_i32, %c0_i32_0 : i32, i32
  }
  func.func @transform_3(%arg0: i32) -> (i32, i32) {
    %c0_i32 = arith.constant 0 : i32
    %c0_i32_0 = arith.constant 0 : i32
    return %arg0, %c0_i32 : i32, i32
  }
}

</mosaic_0001>

<llo_original>
// kernel: _linear_forward.1
$region0: #{_linear_forward.1}
  #allocation0 [shape = 'u32[]', space=smem, size = 0x4, offset = 0x4, fixed_abs, tag = 'smem constant byte address 0x4 - core index']
  #allocation1 [shape = 'u32[144,128]{1,0:T(1,128)}', space=vmem, size = 0x12000, scoped, tag = 'internal scratch']
  %s0 = inlined_call_operand.hbm [shape: f32[2,326], index: 0, kind: input, shape index: {}]
  %s1 = inlined_call_operand.hbm [shape: f32[326,128], index: 1, kind: input, shape index: {}]
  %s2 = inlined_call_operand.vmem [shape: f32[1,62], index: 2, kind: input, shape index: {}]
  %s3 = inlined_call_operand.hbm [shape: f32[2,62], index: 3, kind: output, shape index: {}]
  %s4 = sld [smem:[#allocation0]]
  $region30: #{_linear_forward.1} parent=0
    _
  %s6 = ssub.s32 1, %s4
  %s7 = scalar_select 0, %s6, %s4
  $region1: #{_linear_forward.1} parent=0
    #allocation2 [shape = 'u8[3072]{0}', space=vmem, size = 0xc00, scoped, tag = 'input window, operand 0, single buffered']
    #allocation3 [shape = 's32[1]{0}', space=sflag, size = 0x4, scoped, tag = 'scoped memory for _linear_forward.1']
    #allocation4 [shape = 's32[1]{0}', space=sflag, size = 0x4, scoped, tag = 'scoped memory for _linear_forward.1']
    #allocation5 [shape = 'u8[167936]{0}', space=vmem, size = 0x29000, scoped, tag = 'input window, operand 1, single buffered']
    #allocation6 [shape = 's32[1]{0}', space=sflag, size = 0x4, scoped, tag = 'scoped memory for _linear_forward.1']
    #allocation7 [shape = 'u8[1024]{0}', space=vmem, size = 0x400, scoped, tag = 'output window, operand 0, single buffered']
    %8 = vsyncpa [#allocation3], 0
    %9 = vsyncpa [#allocation6], 0
    %10 = vsyncpa [#allocation4], 0
    // Predicated region
    $region2: #{_linear_forward.1} parent=1 // pred_check
      _
    $region3: #{_linear_forward.1} parent=1 // pred_check_branch
      %12 = sbr.rel (0) target = $region5
    $region4: #{_linear_forward.1} parent=1 // pred_region
      %s14 = ssub.s32 96, 96
      %15 = vsyncadd [#allocation3], %s14
      %s17 = sshll.u32 [#allocation2], 4
      %s18 = int_to_ptr.vmem [resolvable:$true] %s17
      %20 = dma.hbm_to_vmem [thread:$0]  %s0, 96, %s18, [#allocation3]
    $region5: #{_linear_forward.1} parent=1 // pred_fallthru
      _
    // Predicated region
    $region6: #{_linear_forward.1} parent=1 // pred_check
      _
    $region7: #{_linear_forward.1} parent=1 // pred_check_branch
      %22 = sbr.rel (0) target = $region9
    $region8: #{_linear_forward.1} parent=1 // pred_region
      %s24 = ssub.s32 5248, 5248
      %25 = vsyncadd [#allocation6], %s24
      %s26 = sshll.u32 [#allocation5], 4
      %s27 = int_to_ptr.vmem [resolvable:$true] %s26
      %32 = dma.hbm_to_vmem [thread:$0]  %s1, 5248, %s27, [#allocation6], 128, 128, 8
    $region9: #{_linear_forward.1} parent=1 // pred_fallthru
      _
    // Predicated region
    $region10: #{_linear_forward.1} parent=1 // pred_check
      _
    $region11: #{_linear_forward.1} parent=1 // pred_check_branch
      %34 = sbr.rel (0) target = $region13
    $region12: #{_linear_forward.1} parent=1 // pred_region
      _
    $region13: #{_linear_forward.1} parent=1 // pred_fallthru
      _
    // Predicated region
    $region14: #{_linear_forward.1} parent=1 // pred_check
      _
    $region15: #{_linear_forward.1} parent=1 // pred_check_branch
      %36 = sbr.rel (0) target = $region17
    $region16: #{_linear_forward.1} parent=1 // pred_region
      %37 = dma.done [#allocation3], 96
    $region17: #{_linear_forward.1} parent=1 // pred_fallthru
      _
    // Predicated region
    $region18: #{_linear_forward.1} parent=1 // pred_check
      _
    $region19: #{_linear_forward.1} parent=1 // pred_check_branch
      %39 = sbr.rel (0) target = $region21
    $region20: #{_linear_forward.1} parent=1 // pred_region
      %40 = dma.done [#allocation6], 5248
    $region21: #{_linear_forward.1} parent=1 // pred_fallthru
      _
    %v41 = vld [vmem:[#allocation2] sm:$0x3f]
    %v42 = vld [vmem:[#allocation5] sm:$0xff]
    %v43 = vld [vmem:[#allocation5 + $0x8] sm:$0xff]
    %v44 = vld [vmem:[#allocation5 + $0x10] sm:$0xff]
    %v45 = vld [vmem:[#allocation5 + $0x18] sm:$0xff]
    %v46 = vld [vmem:[#allocation5 + $0x20] sm:$0xff]
    %v47 = vld [vmem:[#allocation5 + $0x28] sm:$0xff]
    %v48 = vld [vmem:[#allocation5 + $0x30] sm:$0xff]
    %v49 = vld [vmem:[#allocation5 + $0x38] sm:$0xff]
    %v50 = vld [vmem:[#allocation5 + $0x40] sm:$0xff]
    %v51 = vld [vmem:[#allocation5 + $0x48] sm:$0xff]
    %v52 = vld [vmem:[#allocation5 + $0x50] sm:$0xff]
    %v53 = vld [vmem:[#allocation5 + $0x58] sm:$0xff]
    %v54 = vld [vmem:[#allocation5 + $0x60] sm:$0xff]
    %v55 = vld [vmem:[#allocation5 + $0x68] sm:$0xff]
    %v56 = vld [vmem:[#allocation5 + $0x70] sm:$0xff]
    %v57 = vld [vmem:[#allocation5 + $0x78] sm:$0xff]
    %v58 = vld [vmem:[#allocation5 + $0x80] sm:$0xff]
    %v59 = vld [vmem:[#allocation5 + $0x88] sm:$0xff]
    %v60 = vld [vmem:[#allocation5 + $0x90] sm:$0xff]
    %v61 = vld [vmem:[#allocation5 + $0x98] sm:$0xff]
    %v62 = vld [vmem:[#allocation5 + $0xa0] sm:$0xff]
    %v63 = vld [vmem:[#allocation5 + $0xa8] sm:$0xff]
    %v64 = vld [vmem:[#allocation5 + $0xb0] sm:$0xff]
    %v65 = vld [vmem:[#allocation5 + $0xb8] sm:$0xff]
    %v66 = vld [vmem:[#allocation5 + $0xc0] sm:$0xff]
    %v67 = vld [vmem:[#allocation5 + $0xc8] sm:$0xff]
    %v68 = vld [vmem:[#allocation5 + $0xd0] sm:$0xff]
    %v69 = vld [vmem:[#allocation5 + $0xd8] sm:$0xff]
    %v70 = vld [vmem:[#allocation5 + $0xe0] sm:$0xff]
    %v71 = vld [vmem:[#allocation5 + $0xe8] sm:$0xff]
    %v72 = vld [vmem:[#allocation5 + $0xf0] sm:$0xff]
    %v73 = vld [vmem:[#allocation5 + $0xf8] sm:$0xff]
    %v74 = vld [vmem:[#allocation5 + $0x100] sm:$0xff]
    %v75 = vld [vmem:[#allocation5 + $0x108] sm:$0xff]
    %v76 = vld [vmem:[#allocation5 + $0x110] sm:$0xff]
    %v77 = vld [vmem:[#allocation5 + $0x118] sm:$0xff]
    %v78 = vld [vmem:[#allocation5 + $0x120] sm:$0xff]
    %v79 = vld [vmem:[#allocation5 + $0x128] sm:$0xff]
    %v80 = vld [vmem:[#allocation5 + $0x130] sm:$0xff]
    %v81 = vld [vmem:[#allocation5 + $0x138] sm:$0xff]
    %v82 = vld [vmem:[#allocation5 + $0x140] sm:$0x3f]
    %v84 = vcombine.high %v41, %v41
    %v86 = vunpack.c.l.s4 1983009808
    %v87 = vunpack.c.0.s8 %v86
    %v88 = vlaneseq
    %v89 = vshrl.u32 %v88, 7
    %v90 = vsub.s32 %v87, %v89
    %v91 = vrot.slane %v41, %v90
    %v93 = vunpack.c.l.s4 1983009808
    %v94 = vunpack.c.0.s8 %v93
    %v95 = vlaneseq
    %v96 = vshrl.u32 %v95, 7
    %v97 = vsub.s32 %v94, %v96
    %v98 = vrot.slane %v84, %v97
    %v99 = vcombine.high %v91, %v91
    %vm102 = vcmask 572416
    %v103 = vsel %vm102, %v98, 0
    %vm105 = vcmask 1045504
    %v107 = vsel %vm105, %v82, 0
    %109 = vmatprep.subr.mxu0 0.0
    %110 = vmatpush1.msra.mxu0 %v42
    %111 = vmatprep.subr.mxu0 0.0
    %112 = vmatpush1.msra.mxu0 %v43
    %113 = vmatprep.subr.mxu0 0.0
    %114 = vmatpush1.msra.mxu0 %v44
    %115 = vmatprep.subr.mxu0 0.0
    %116 = vmatpush1.msra.mxu0 %v45
    %117 = vmatprep.subr.mxu0 0.0
    %118 = vmatpush1.msra.mxu0 %v46
    %119 = vmatprep.subr.mxu0 0.0
    %120 = vmatpush1.msra.mxu0 %v47
    %121 = vmatprep.subr.mxu0 0.0
    %122 = vmatpush1.msra.mxu0 %v48
    %123 = vmatprep.subr.mxu0 0.0
    %124 = vmatpush1.msra.mxu0 %v49
    %125 = vmatprep.subr.mxu0 0.0
    %126 = vmatpush1.msra.mxu0 %v50
    %127 = vmatprep.subr.mxu0 0.0
    %128 = vmatpush1.msra.mxu0 %v51
    %129 = vmatprep.subr.mxu0 0.0
    %130 = vmatpush1.msra.mxu0 %v52
    %131 = vmatprep.subr.mxu0 0.0
    %132 = vmatpush1.msra.mxu0 %v53
    %133 = vmatprep.subr.mxu0 0.0
    %134 = vmatpush1.msra.mxu0 %v54
    %135 = vmatprep.subr.mxu0 0.0
    %136 = vmatpush1.msra.mxu0 %v55
    %137 = vmatprep.subr.mxu0 0.0
    %138 = vmatpush1.msra.mxu0 %v56
    %139 = vmatprep.subr.mxu0 0.0
    %140 = vmatpush1.msra.mxu0 %v57
    %141 = vmatprep.subr.mxu0 0.0
    %142 = vmatpush1.msra.mxu0 %v58
    %143 = vmatprep.subr.mxu0 0.0
    %144 = vmatpush1.msra.mxu0 %v59
    %145 = vmatprep.subr.mxu0 0.0
    %146 = vmatpush1.msra.mxu0 %v60
    %147 = vmatprep.subr.mxu0 0.0
    %148 = vmatpush1.msra.mxu0 %v61
    %149 = vmatprep.subr.mxu0 0.0
    %150 = vmatpush1.msra.mxu0 %v62
    %151 = vmatprep.subr.mxu0 0.0
    %152 = vmatpush1.msra.mxu0 %v63
    %153 = vmatprep.subr.mxu0 0.0
    %154 = vmatpush1.msra.mxu0 %v64
    %155 = vmatprep.subr.mxu0 0.0
    %156 = vmatpush1.msra.mxu0 %v65
    %157 = vmatprep.subr.mxu0 0.0
    %158 = vmatpush1.msra.mxu0 %v66
    %159 = vmatprep.subr.mxu0 0.0
    %160 = vmatpush1.msra.mxu0 %v67
    %161 = vmatprep.subr.mxu0 0.0
    %162 = vmatpush1.msra.mxu0 %v68
    %163 = vmatprep.subr.mxu0 0.0
    %164 = vmatpush1.msra.mxu0 %v69
    %165 = vmatprep.subr.mxu0 0.0
    %166 = vmatpush1.msra.mxu0 %v70
    %167 = vmatprep.subr.mxu0 0.0
    %168 = vmatpush1.msra.mxu0 %v71
    %169 = vmatprep.subr.mxu0 0.0
    %170 = vmatpush1.msra.mxu0 %v72
    %171 = vmatprep.subr.mxu0 0.0
    %172 = vmatpush1.msra.mxu0 %v73
    %173 = vmatprep.mubr.f32.mxu0 %v99
    %174 = vmatmul.mubr.f32.gmra.mrb[0].mxu0 %v91
    %v175 = vpop.f32.mrb[0].mxu0
    %v176 = vadd.f32 0.0, %v175
    %v177 = vpop.f32.mrb[0].mxu0
    %178 = vdwg.mxu0
    %179 = vmatprep.subr.mxu0 0.0
    %180 = vmatpush1.msra.mxu0 %v74
    %181 = vmatprep.subr.mxu0 0.0
    %182 = vmatpush1.msra.mxu0 %v75
    %183 = vmatprep.subr.mxu0 0.0
    %184 = vmatpush1.msra.mxu0 %v76
    %185 = vmatprep.subr.mxu0 0.0
    %186 = vmatpush1.msra.mxu0 %v77
    %187 = vmatprep.subr.mxu0 0.0
    %188 = vmatpush1.msra.mxu0 %v78
    %189 = vmatprep.subr.mxu0 0.0
    %190 = vmatpush1.msra.mxu0 %v79
    %191 = vmatprep.subr.mxu0 0.0
    %192 = vmatpush1.msra.mxu0 %v80
    %193 = vmatprep.subr.mxu0 0.0
    %194 = vmatpush1.msra.mxu0 %v81
    %195 = vmatprep.subr.mxu0 0.0
    %196 = vmatpush1.msra.mxu0 %v107
    %197 = vmatprep.subr.mxu0 0.0
    %198 = vmatpush1.msra.mxu0 0.0
    %199 = vmatprep.subr.mxu0 0.0
    %200 = vmatpush1.msra.mxu0 0.0
    %201 = vmatprep.subr.mxu0 0.0
    %202 = vmatpush1.msra.mxu0 0.0
    %203 = vmatprep.subr.mxu0 0.0
    %204 = vmatpush1.msra.mxu0 0.0
    %205 = vmatprep.subr.mxu0 0.0
    %206 = vmatpush1.msra.mxu0 0.0
    %207 = vmatprep.subr.mxu0 0.0
    %208 = vmatpush1.msra.mxu0 0.0
    %209 = vmatprep.subr.mxu0 0.0
    %210 = vmatpush1.msra.mxu0 0.0
    %211 = vmatprep.subr.mxu0 0.0
    %212 = vmatpush1.msra.mxu0 0.0
    %213 = vmatprep.subr.mxu0 0.0
    %214 = vmatpush1.msra.mxu0 0.0
    %215 = vmatprep.subr.mxu0 0.0
    %216 = vmatpush1.msra.mxu0 0.0
    %217 = vmatprep.subr.mxu0 0.0
    %218 = vmatpush1.msra.mxu0 0.0
    %219 = vmatprep.subr.mxu0 0.0
    %220 = vmatpush1.msra.mxu0 0.0
    %221 = vmatprep.subr.mxu0 0.0
    %222 = vmatpush1.msra.mxu0 0.0
    %223 = vmatprep.subr.mxu0 0.0
    %224 = vmatpush1.msra.mxu0 0.0
    %225 = vmatprep.subr.mxu0 0.0
    %226 = vmatpush1.msra.mxu0 0.0
    %227 = vmatprep.subr.mxu0 0.0
    %228 = vmatpush1.msra.mxu0 0.0
    %229 = vmatprep.subr.mxu0 0.0
    %230 = vmatpush1.msra.mxu0 0.0
    %231 = vmatprep.subr.mxu0 0.0
    %232 = vmatpush1.msra.mxu0 0.0
    %233 = vmatprep.subr.mxu0 0.0
    %234 = vmatpush1.msra.mxu0 0.0
    %235 = vmatprep.subr.mxu0 0.0
    %236 = vmatpush1.msra.mxu0 0.0
    %237 = vmatprep.subr.mxu0 0.0
    %238 = vmatpush1.msra.mxu0 0.0
    %239 = vmatprep.subr.mxu0 0.0
    %240 = vmatpush1.msra.mxu0 0.0
    %241 = vmatprep.subr.mxu0 0.0
    %242 = vmatpush1.msra.mxu0 0.0
    %243 = vmatprep.mubr.f32.mxu0 0.0
    %244 = vmatmul.mubr.f32.gmra.mrb[0].mxu0 %v103
    %v245 = vpop.f32.mrb[0].mxu0
    %v246 = vadd.f32 %v176, %v245
    %v247 = vpop.f32.mrb[0].mxu0
    %248 = vdwg.mxu0
    %v249 = vld [vmem:[%s2] sm:$0x1]
    %v251 = vlaneseq
    %v252 = vshrl.u32 %v251, 7
    %v253 = vsub.s32 0, %v252
    %v254 = vrot.slane %v249, %v253
    %v256 = vadd.f32 %v246, %v254
    %vm257 = vcmask 500736
    %258 = vst.msk [vmem:[#allocation7] sm:$0x3] %vm257, %v256
    // Predicated region
    $region22: #{_linear_forward.1} parent=1 // pred_check
      _
    $region23: #{_linear_forward.1} parent=1 // pred_check_branch
      %260 = sbr.rel (0) target = $region25
    $region24: #{_linear_forward.1} parent=1 // pred_region
      %s262 = ssub.s32 32, 32
      %263 = vsyncadd [#allocation4], %s262
      %s265 = sshll.u32 [#allocation7], 4
      %s266 = int_to_ptr.vmem [resolvable:$true] %s265
      %268 = dma.vmem_to_hbm [thread:$0]  %s266, 32, %s3, [#allocation4]
    $region25: #{_linear_forward.1} parent=1 // pred_fallthru
      _
    // Predicated region
    $region26: #{_linear_forward.1} parent=1 // pred_check
      _
    $region27: #{_linear_forward.1} parent=1 // pred_check_branch
      %270 = sbr.rel (0) target = $region29
    $region28: #{_linear_forward.1} parent=1 // pred_region
      %271 = dma.done [#allocation4], 32
    $region29: #{_linear_forward.1} parent=1 // pred_fallthru
      _
    %272 = vsyncpa [#allocation3], 1
    %273 = vsyncpa [#allocation6], 1
    %274 = vsyncpa [#allocation4], 1

</llo_original>
